<compile_context>
chip_gen: v7x
topology: tpu7x:2x2x1
jax: 0.10.0
libtpu: 0.0.40
codegen_flags: <defaults>
</compile_context>

<pallas_src>
import functools

import jax
import jax.numpy as jnp
import numpy as np
from jax.experimental import pallas as pl
from jax.experimental.pallas import tpu as pltpu


_VMEM_BUDGET = 40 * 1024 * 1024   # conservative tile budget (v7x has 64 MiB physical)
_VMEM_CAP = 64 * 1024 * 1024


def _round_up(x, m):
    return ((x + m - 1) // m) * m


# ---------------------------------------------------------------------------
# Kernel: fused LayerNorm (affine folded into W/b) + Linear on a row tile.
#   x: (TR, H)   w: (H, Lpad)   bias: (1, Lpad)   out: (TR, Lpad)
# ---------------------------------------------------------------------------
def _ln_matmul_kernel(x_ref, w_ref, bias_ref, o_ref, *, eps):
    x = x_ref[...].astype(jnp.float32)
    mean = jnp.mean(x, axis=-1, keepdims=True)
    meansq = jnp.mean(x * x, axis=-1, keepdims=True)
    var = jnp.maximum(meansq - mean * mean, 0.0)        # biased var (matches torch)
    inv = jax.lax.rsqrt(var + eps)                      # EUP slot
    xn = (x - mean) * inv                               # affine is folded into w/bias
    out = jnp.dot(xn.astype(w_ref.dtype), w_ref[...],
                  preferred_element_type=jnp.float32)   # MXU, f32 accumulate
    out = out + bias_ref[0].astype(jnp.float32)
    o_ref[...] = out.astype(o_ref.dtype)


# ---------------------------------------------------------------------------
# Kernel: LayerNorm only (num_labels == 0 -> dense is Identity).
# ---------------------------------------------------------------------------
def _layernorm_kernel(x_ref, g_ref, b_ref, o_ref, *, eps):
    x = x_ref[...].astype(jnp.float32)
    mean = jnp.mean(x, axis=-1, keepdims=True)
    meansq = jnp.mean(x * x, axis=-1, keepdims=True)
    var = jnp.maximum(meansq - mean * mean, 0.0)
    inv = jax.lax.rsqrt(var + eps)
    y = (x - mean) * inv * g_ref[0].astype(jnp.float32) + b_ref[0].astype(jnp.float32)
    o_ref[...] = y.astype(o_ref.dtype)


# ---------------------------------------------------------------------------
# Wrapper
# ---------------------------------------------------------------------------
def ssast_mlp_head(hidden_state, gamma, beta, weight=None, bias=None, *,
                   eps=1e-12, row_block=None, matmul_dtype=jnp.bfloat16):
    """Fused SSASTMLPHead forward.

    hidden_state: (..., H)
    gamma, beta:  (H,) LayerNorm affine params.
    weight:       (H, L) dense weight already transposed from torch's (L, H),
                  so out = LN(x) @ weight + bias.  None -> Identity dense.
    bias:         (L,) or None.
    matmul_dtype: dtype for MXU operands of the projection (default bf16);
                  None keeps the projection fully in f32.
    """
    orig_shape = hidden_state.shape
    H = int(orig_shape[-1])
    R = int(np.prod(orig_shape[:-1])) if len(orig_shape) > 1 else 1
    dtype = hidden_state.dtype
    xbytes = jnp.dtype(dtype).itemsize
    x2 = hidden_state.reshape(R, H)

    # ---------------- num_labels == 0: fused LayerNorm only ----------------
    if weight is None:
        if row_block is None:
            per_row = 2 * 2 * H * xbytes                    # double-buffered x + out tiles
            rb = (_VMEM_BUDGET - 2 * H * 4) // max(per_row, 1)
            rb = max(8, (min(rb, 2048) // 8) * 8)
            row_block = int(min(rb, _round_up(R, 8)))
        row_block = max(8, (row_block // 8) * 8)
        Rpad = _round_up(R, row_block)
        if Rpad != R:
            x2 = jnp.pad(x2, ((0, Rpad - R), (0, 0)))
        grid = (Rpad // row_block,)

        x_spec = pl.BlockSpec((row_block, H), lambda r: (r, 0))
        vecH_spec = pl.BlockSpec((1, H), lambda r: (0, 0))   # grid-invariant residents

        needed = 2 * (2 * row_block * H * xbytes + 2 * H * 4)
        vmem_limit = int(min(_VMEM_CAP, max(needed, 16 * 1024 * 1024)))
        cost = pl.CostEstimate(flops=6 * Rpad * H, transcendentals=Rpad,
                               bytes_accessed=2 * Rpad * H * xbytes)

        out2 = pl.pallas_call(
            functools.partial(_layernorm_kernel, eps=eps),
            grid=grid,
            in_specs=[x_spec, vecH_spec, vecH_spec],
            out_specs=x_spec,
            out_shape=jax.ShapeDtypeStruct((Rpad, H), dtype),
            compiler_params=pltpu.CompilerParams(
                dimension_semantics=("parallel",),
                vmem_limit_bytes=vmem_limit),
            cost_estimate=cost,
        )(x2, gamma.reshape(1, H), beta.reshape(1, H))
        return out2[:R].reshape(orig_shape)

    # ---------------- Linear path: fold affine, pad L, pad R ----------------
    L = int(weight.shape[-1])
    Lpad = _round_up(max(L, 1), 128)

    wf = gamma.astype(jnp.float32)[:, None] * weight.astype(jnp.float32)   # (H, L)
    bf = beta.astype(jnp.float32) @ weight.astype(jnp.float32)             # (L,)
    if bias is not None:
        bf = bf + bias.astype(jnp.float32)
    if Lpad != L:
        wf = jnp.pad(wf, ((0, 0), (0, Lpad - L)))     # zero padded columns
        bf = jnp.pad(bf, (0, Lpad - L))
    w = wf if matmul_dtype is None else wf.astype(matmul_dtype)
    wbytes = jnp.dtype(w.dtype).itemsize

    if row_block is None:
        resident = H * Lpad * wbytes + 2 * Lpad * 4
        per_row = 2 * (H * xbytes + Lpad * xbytes)    # double-buffered x + out tiles
        rb = (_VMEM_BUDGET - resident) // max(per_row, 1)
        rb = max(8, (min(rb, 2048) // 8) * 8)
        row_block = int(min(rb, _round_up(R, 8)))
    row_block = max(8, (row_block // 8) * 8)
    Rpad = _round_up(R, row_block)
    if Rpad != R:
        x2 = jnp.pad(x2, ((0, Rpad - R), (0, 0)))     # zero rows: var=0, rsqrt(eps) finite
    grid = (Rpad // row_block,)

    x_spec = pl.BlockSpec((row_block, H), lambda r: (r, 0))
    w_spec = pl.BlockSpec((H, Lpad), lambda r: (0, 0))        # grid-invariant resident
    bias_spec = pl.BlockSpec((1, Lpad), lambda r: (0, 0))     # grid-invariant resident
    o_spec = pl.BlockSpec((row_block, Lpad), lambda r: (r, 0))  # lane-dense full-Lpad block

    needed = 2 * (2 * row_block * (H + Lpad) * xbytes + H * Lpad * wbytes + 2 * Lpad * 4)
    vmem_limit = int(min(_VMEM_CAP, max(needed, 16 * 1024 * 1024)))
    cost = pl.CostEstimate(
        flops=2 * Rpad * H * Lpad,
        transcendentals=Rpad,
        bytes_accessed=Rpad * H * xbytes + Rpad * Lpad * xbytes + H * Lpad * wbytes)

    out2 = pl.pallas_call(
        functools.partial(_ln_matmul_kernel, eps=eps),
        grid=grid,
        in_specs=[x_spec, w_spec, bias_spec],
        out_specs=o_spec,
        out_shape=jax.ShapeDtypeStruct((Rpad, Lpad), dtype),
        compiler_params=pltpu.CompilerParams(
            dimension_semantics=("parallel",),
            vmem_limit_bytes=vmem_limit),
        cost_estimate=cost,
    )(x2, w, bf.reshape(1, Lpad))

    out2 = out2[:R, :L]
    return out2.reshape(orig_shape[:-1] + (L,))


# ---------------------------------------------------------------------------
# Pure-JAX reference (matches torch LayerNorm + Linear semantics)
# ---------------------------------------------------------------------------
def reference(x, gamma, beta, weight, bias, eps):
    mean = jnp.mean(x, axis=-1, keepdims=True)
    var = jnp.mean((x - mean) ** 2, axis=-1, keepdims=True)
    y = (x - mean) / jnp.sqrt(var + eps) * gamma + beta
    if weight is None:
        return y
    return y @ weight + bias


if __name__ == "__main__":
    # Small config consistent with the module: batch=2, seq=8, hidden=32, labels=16.
    B, S, H, L = 2, 8, 32, 16
    eps = 1e-12

    key = jax.random.PRNGKey(0)
    kx, kg, kb, kw, kbi = jax.random.split(key, 5)

    hidden_state = jax.random.normal(kx, (B, S, H), dtype=jnp.float32)
    gamma = 1.0 + 0.1 * jax.random.normal(kg, (H,), dtype=jnp.float32)
    beta = 0.1 * jax.random.normal(kb, (H,), dtype=jnp.float32)
    # torch nn.Linear stores weight as (out, in) = (L, H); y = x @ W.T + b.
    # We pass the weight already transposed to (H, L), same semantics.
    weight = 0.02 * jax.random.normal(kw, (H, L), dtype=jnp.float32)
    bias = 0.02 * jax.random.normal(kbi, (L,), dtype=jnp.float32)

    out_ref = reference(hidden_state, gamma, beta, weight, bias, eps)

    # Full-f32 projection path: tight tolerance.
    out_f32 = ssast_mlp_head(hidden_state, gamma, beta, weight, bias,
                             eps=eps, matmul_dtype=None)
    jax.block_until_ready(out_f32)
    np.testing.assert_allclose(np.asarray(out_f32), np.asarray(out_ref),
                               rtol=1e-5, atol=1e-5)

    # Default bf16 MXU path: looser tolerance (documented ~1e-2 relative).
    out_bf16 = ssast_mlp_head(hidden_state, gamma, beta, weight, bias, eps=eps)
    jax.block_until_ready(out_bf16)
    np.testing.assert_allclose(np.asarray(out_bf16), np.asarray(out_ref),
                               rtol=2e-2, atol=2e-2)

    # num_labels == 0 (Identity dense) path.
    out_ln = ssast_mlp_head(hidden_state, gamma, beta, None, None, eps=eps)
    jax.block_until_ready(out_ln)
    np.testing.assert_allclose(
        np.asarray(out_ln),
        np.asarray(reference(hidden_state, gamma, beta, None, None, eps)),
        rtol=1e-5, atol=1e-5)

    print("KERNEL_OK")
</pallas_src>

<mosaic_0001>
module attributes {stable_mosaic.version = 11 : i64} {
  func.func @_ln_matmul_kernel(%arg0: i32, %arg1: memref<16x32xf32, #tpu.memory_space<vmem>>, %arg2: memref<32x128xf32, #tpu.memory_space<vmem>>, %arg3: memref<1x128xf32, #tpu.memory_space<vmem>>, %arg4: memref<16x128xf32, #tpu.memory_space<vmem>>) attributes {dimension_semantics = [#tpu.dimension_semantics<parallel>], iteration_bounds = array<i64: 1>, scalar_prefetch = 0 : i64, scratch_operands = 0 : i64, tpu.core_type = #tpu.core_type<tc>, window_params = [{transform_indices = @transform_0, window_bounds = array<i64: 16, 32>}, {pipeline_mode = #tpu.pipeline_mode<synchronous>, transform_indices = @transform_1, window_bounds = array<i64: 32, 128>}, {pipeline_mode = #tpu.pipeline_mode<synchronous>, transform_indices = @transform_2, window_bounds = array<i64: 1, 128>}, {transform_indices = @transform_3, window_bounds = array<i64: 16, 128>}]} {
    %c0 = arith.constant 0 : index
    %c0_0 = arith.constant 0 : index
    %0 = vector.load %arg1[%c0, %c0_0] : memref<16x32xf32, #tpu.memory_space<vmem>>, vector<16x32xf32>
    %cst = arith.constant dense<0.000000e+00> : vector<16xf32>
    %1 = vector.multi_reduction <add>, %0, %cst [1] : vector<16x32xf32> to vector<16xf32>
    %2 = vector.shape_cast %1 : vector<16xf32> to vector<16x1xf32>
    %cst_1 = arith.constant 3.200000e+01 : f32
    %3 = vector.broadcast %cst_1 : f32 to vector<16x1xf32>
    %4 = arith.divf %2, %3 : vector<16x1xf32>
    %5 = arith.mulf %0, %0 : vector<16x32xf32>
    %cst_2 = arith.constant dense<0.000000e+00> : vector<16xf32>
    %6 = vector.multi_reduction <add>, %5, %cst_2 [1] : vector<16x32xf32> to vector<16xf32>
    %7 = vector.shape_cast %6 : vector<16xf32> to vector<16x1xf32>
    %cst_3 = arith.constant 3.200000e+01 : f32
    %8 = vector.broadcast %cst_3 : f32 to vector<16x1xf32>
    %9 = arith.divf %7, %8 : vector<16x1xf32>
    %10 = arith.mulf %4, %4 : vector<16x1xf32>
    %11 = arith.subf %9, %10 : vector<16x1xf32>
    %cst_4 = arith.constant 0.000000e+00 : f32
    %12 = vector.broadcast %cst_4 : f32 to vector<16x1xf32>
    %13 = arith.maximumf %11, %12 : vector<16x1xf32>
    %cst_5 = arith.constant 9.99999996E-13 : f32
    %14 = vector.broadcast %cst_5 : f32 to vector<16x1xf32>
    %15 = arith.addf %13, %14 : vector<16x1xf32>
    %16 = math.rsqrt %15 : vector<16x1xf32>
    %17 = vector.broadcast %4 : vector<16x1xf32> to vector<16x32xf32>
    %18 = arith.subf %0, %17 : vector<16x32xf32>
    %19 = vector.broadcast %16 : vector<16x1xf32> to vector<16x32xf32>
    %20 = arith.mulf %18, %19 : vector<16x32xf32>
    %c0_6 = arith.constant 0 : index
    %c0_7 = arith.constant 0 : index
    %21 = vector.load %arg2[%c0_6, %c0_7] : memref<32x128xf32, #tpu.memory_space<vmem>>, vector<32x128xf32>
    %cst_8 = arith.constant dense<0.000000e+00> : vector<16x128xf32>
    %22 = tpu.matmul %20, %21, %cst_8 {dimension_numbers = #tpu.dot_dimension_numbers<[1], [0], [0], [1], [0, 0, 1, 1], [], []>} : vector<16x32xf32>, vector<32x128xf32>, vector<16x128xf32> -> vector<16x128xf32>
    %c0_9 = arith.constant 0 : index
    %c0_10 = arith.constant 0 : index
    %23 = vector.load %arg3[%c0_9, %c0_10] : memref<1x128xf32, #tpu.memory_space<vmem>>, vector<1x128xf32>
    %24 = vector.shape_cast %23 : vector<1x128xf32> to vector<128xf32>
    %25 = vector.shape_cast %24 : vector<128xf32> to vector<1x128xf32>
    %26 = vector.broadcast %25 : vector<1x128xf32> to vector<16x128xf32>
    %27 = arith.addf %22, %26 : vector<16x128xf32>
    %c0_11 = arith.constant 0 : index
    %c0_12 = arith.constant 0 : index
    %28 = vector.load %arg4[%c0_11, %c0_12] : memref<16x128xf32, #tpu.memory_space<vmem>>, vector<16x128xf32>
    tpu.vector_store %arg4[%c0_11, %c0_12], %27 {strides = array<i32>} : memref<16x128xf32, #tpu.memory_space<vmem>>, vector<16x128xf32>,
    return
  }
  func.func @transform_0(%arg0: i32) -> (i32, i32) {
    %c0_i32 = arith.constant 0 : i32
    %c0_i32_0 = arith.constant 0 : i32
    return %arg0, %c0_i32 : i32, i32
  }
  func.func @transform_1(%arg0: i32) -> (i32, i32) {
    %c0_i32 = arith.constant 0 : i32
    %c0_i32_0 = arith.constant 0 : i32
    %c0_i32_1 = arith.constant 0 : i32
    return %c0_i32, %c0_i32_0 : i32, i32
  }
  func.func @transform_2(%arg0: i32) -> (i32, i32) {
    %c0_i32 = arith.constant 0 : i32
    %c0_i32_0 = arith.constant 0 : i32
    %c0_i32_1 = arith.constant 0 : i32
    return %c0_i32, %c0_i32_0 : i32, i32
  }
  func.func @transform_3(%arg0: i32) -> (i32, i32) {
    %c0_i32 = arith.constant 0 : i32
    %c0_i32_0 = arith.constant 0 : i32
    return %arg0, %c0_i32 : i32, i32
  }
}

</mosaic_0001>

<llo_original>
// kernel: tpu_custom_call.1
$region0: #{tpu_custom_call.1}
  #allocation0 [shape = 'u32[]', space=smem, size = 0x4, offset = 0x4, fixed_abs, tag = 'smem constant byte address 0x4 - core index']
  #allocation1 [shape = 'u32[144,128]{1,0:T(1,128)}', space=vmem, size = 0x12000, scoped, tag = 'internal scratch']
  %s0 = inlined_call_operand.hbm [shape: f32[16,32], index: 0, kind: input, shape index: {}]
  %s1 = inlined_call_operand.hbm [shape: f32[32,128], index: 1, kind: input, shape index: {}]
  %s2 = inlined_call_operand.vmem [shape: f32[1,128], index: 2, kind: input, shape index: {}]
  %s3 = inlined_call_operand.hbm [shape: f32[16,128], index: 3, kind: output, shape index: {}]
  %s4 = sld [smem:[#allocation0]]
  $region30: #{tpu_custom_call.1} parent=0
    _
  %s6 = ssub.s32 1, %s4
  %s7 = scalar_select 0, %s6, %s4
  $region1: #{tpu_custom_call.1} parent=0
    #allocation2 [shape = 'u8[8192]{0}', space=vmem, size = 0x2000, scoped, tag = 'input window, operand 0, single buffered']
    #allocation3 [shape = 's32[1]{0}', space=sflag, size = 0x4, scoped, tag = 'scoped memory for tpu_custom_call.1']
    #allocation4 [shape = 's32[1]{0}', space=sflag, size = 0x4, scoped, tag = 'scoped memory for tpu_custom_call.1']
    #allocation5 [shape = 'u8[16384]{0}', space=vmem, size = 0x4000, scoped, tag = 'input window, operand 1, single buffered']
    #allocation6 [shape = 's32[1]{0}', space=sflag, size = 0x4, scoped, tag = 'scoped memory for tpu_custom_call.1']
    #allocation7 [shape = 'u8[8192]{0}', space=vmem, size = 0x2000, scoped, tag = 'output window, operand 0, single buffered']
    %8 = vsyncpa [#allocation3], 0
    %9 = vsyncpa [#allocation6], 0
    %10 = vsyncpa [#allocation4], 0
    // Predicated region
    $region2: #{tpu_custom_call.1} parent=1 // pred_check
      _
    $region3: #{tpu_custom_call.1} parent=1 // pred_check_branch
      %12 = sbr.rel (0) target = $region5
    $region4: #{tpu_custom_call.1} parent=1 // pred_region
      %s14 = ssub.s32 256, 256
      %15 = vsyncadd [#allocation3], %s14
      %s16 = sshll.u32 [#allocation2], 4
      %s17 = int_to_ptr.vmem [resolvable:$true] %s16
      %22 = dma.hbm_to_vmem [thread:$0]  %s0, 256, %s17, [#allocation3], 128, 128, 8
    $region5: #{tpu_custom_call.1} parent=1 // pred_fallthru
      _
    // Predicated region
    $region6: #{tpu_custom_call.1} parent=1 // pred_check
      _
    $region7: #{tpu_custom_call.1} parent=1 // pred_check_branch
      %24 = sbr.rel (0) target = $region9
    $region8: #{tpu_custom_call.1} parent=1 // pred_region
      %s26 = ssub.s32 512, 512
      %27 = vsyncadd [#allocation6], %s26
      %s28 = sshll.u32 [#allocation5], 4
      %s29 = int_to_ptr.vmem [resolvable:$true] %s28
      %34 = dma.hbm_to_vmem [thread:$0]  %s1, 512, %s29, [#allocation6], 128, 128, 8
    $region9: #{tpu_custom_call.1} parent=1 // pred_fallthru
      _
    // Predicated region
    $region10: #{tpu_custom_call.1} parent=1 // pred_check
      _
    $region11: #{tpu_custom_call.1} parent=1 // pred_check_branch
      %36 = sbr.rel (0) target = $region13
    $region12: #{tpu_custom_call.1} parent=1 // pred_region
      _
    $region13: #{tpu_custom_call.1} parent=1 // pred_fallthru
      _
    // Predicated region
    $region14: #{tpu_custom_call.1} parent=1 // pred_check
      _
    $region15: #{tpu_custom_call.1} parent=1 // pred_check_branch
      %38 = sbr.rel (0) target = $region17
    $region16: #{tpu_custom_call.1} parent=1 // pred_region
      %39 = dma.done [#allocation3], 256
    $region17: #{tpu_custom_call.1} parent=1 // pred_fallthru
      _
    // Predicated region
    $region18: #{tpu_custom_call.1} parent=1 // pred_check
      _
    $region19: #{tpu_custom_call.1} parent=1 // pred_check_branch
      %41 = sbr.rel (0) target = $region21
    $region20: #{tpu_custom_call.1} parent=1 // pred_region
      %42 = dma.done [#allocation6], 512
    $region21: #{tpu_custom_call.1} parent=1 // pred_fallthru
      _
    %v43 = vld [vmem:[#allocation2] sm:$0xff]
    %v44 = vld [vmem:[#allocation2 + $0x8] sm:$0xff]
    %vm45 = vcmask 261120
    %v46 = vsel %vm45, %v43, 0.0
    %47 = vadd.xlane.f32.xlu0 %v46
    %v48 = vpop.xlane.xlu0 %47
    %v49 = vsel %vm45, %v44, 0.0
    %50 = vadd.xlane.f32.xlu0 %v49
    %v51 = vpop.xlane.xlu0 %50
    %v52 = vrcp.pop 32.0
    %v53 = vmul.f32 %v48, %v52
    %v54 = vmul.f32 %v51, %v52
    %v55 = vmul.f32 %v43, %v43
    %v56 = vmul.f32 %v44, %v44
    %v57 = vsel %vm45, %v55, 0.0
    %58 = vadd.xlane.f32.xlu0 %v57
    %v59 = vpop.xlane.xlu0 %58
    %v60 = vsel %vm45, %v56, 0.0
    %61 = vadd.xlane.f32.xlu0 %v60
    %v62 = vpop.xlane.xlu0 %61
    %v63 = vmul.f32 %v59, %v52
    %v64 = vmul.f32 %v62, %v52
    %v65 = vmul.f32 %v53, %v53
    %v66 = vmul.f32 %v54, %v54
    %v67 = vsub.f32 %v63, %v65
    %v68 = vsub.f32 %v64, %v66
    %v69 = vmax.f32 %v67, 0.0
    %v70 = vmax.f32 %v68, 0.0
    %v71 = vadd.f32 %v69, 1e-12
    %v72 = vadd.f32 %v70, 1e-12
    %v73 = vrsqrt.pop %v71
    %v74 = vrsqrt.pop %v72
    %v75 = vsub.f32 %v43, %v53
    %v76 = vsub.f32 %v44, %v54
    %v77 = vmul.f32 %v75, %v73
    %v78 = vmul.f32 %v76, %v74
    %v79 = vld [vmem:[#allocation5] sm:$0xff]
    %v80 = vld [vmem:[#allocation5 + $0x8] sm:$0xff]
    %v81 = vld [vmem:[#allocation5 + $0x10] sm:$0xff]
    %v82 = vld [vmem:[#allocation5 + $0x18] sm:$0xff]
    %v83 = vld [vmem:[%s2] sm:$0x1]
    %v85 = vlaneseq
    %v86 = vshrl.u32 %v85, 7
    %v87 = vsub.s32 0, %v86
    %v88 = vrot.slane %v83, %v87
    %v91 = vsel %vm45, %v77, 0
    %v94 = vsel %vm45, %v78, 0
    %96 = vmatprep.subr.mxu0 0.0
    %97 = vmatpush1.msra.mxu0 %v79
    %98 = vmatprep.subr.mxu0 0.0
    %99 = vmatpush1.msra.mxu0 %v80
    %100 = vmatprep.subr.mxu0 0.0
    %101 = vmatpush1.msra.mxu0 %v81
    %102 = vmatprep.subr.mxu0 0.0
    %103 = vmatpush1.msra.mxu0 %v82
    %104 = vmatprep.subr.mxu0 0.0
    %105 = vmatpush1.msra.mxu0 0.0
    %106 = vmatprep.subr.mxu0 0.0
    %107 = vmatpush1.msra.mxu0 0.0
    %108 = vmatprep.subr.mxu0 0.0
    %109 = vmatpush1.msra.mxu0 0.0
    %110 = vmatprep.subr.mxu0 0.0
    %111 = vmatpush1.msra.mxu0 0.0
    %112 = vmatprep.subr.mxu0 0.0
    %113 = vmatpush1.msra.mxu0 0.0
    %114 = vmatprep.subr.mxu0 0.0
    %115 = vmatpush1.msra.mxu0 0.0
    %116 = vmatprep.subr.mxu0 0.0
    %117 = vmatpush1.msra.mxu0 0.0
    %118 = vmatprep.subr.mxu0 0.0
    %119 = vmatpush1.msra.mxu0 0.0
    %120 = vmatprep.subr.mxu0 0.0
    %121 = vmatpush1.msra.mxu0 0.0
    %122 = vmatprep.subr.mxu0 0.0
    %123 = vmatpush1.msra.mxu0 0.0
    %124 = vmatprep.subr.mxu0 0.0
    %125 = vmatpush1.msra.mxu0 0.0
    %126 = vmatprep.subr.mxu0 0.0
    %127 = vmatpush1.msra.mxu0 0.0
    %128 = vmatprep.subr.mxu0 0.0
    %129 = vmatpush1.msra.mxu0 0.0
    %130 = vmatprep.subr.mxu0 0.0
    %131 = vmatpush1.msra.mxu0 0.0
    %132 = vmatprep.subr.mxu0 0.0
    %133 = vmatpush1.msra.mxu0 0.0
    %134 = vmatprep.subr.mxu0 0.0
    %135 = vmatpush1.msra.mxu0 0.0
    %136 = vmatprep.subr.mxu0 0.0
    %137 = vmatpush1.msra.mxu0 0.0
    %138 = vmatprep.subr.mxu0 0.0
    %139 = vmatpush1.msra.mxu0 0.0
    %140 = vmatprep.subr.mxu0 0.0
    %141 = vmatpush1.msra.mxu0 0.0
    %142 = vmatprep.subr.mxu0 0.0
    %143 = vmatpush1.msra.mxu0 0.0
    %144 = vmatprep.subr.mxu0 0.0
    %145 = vmatpush1.msra.mxu0 0.0
    %146 = vmatprep.subr.mxu0 0.0
    %147 = vmatpush1.msra.mxu0 0.0
    %148 = vmatprep.subr.mxu0 0.0
    %149 = vmatpush1.msra.mxu0 0.0
    %150 = vmatprep.subr.mxu0 0.0
    %151 = vmatpush1.msra.mxu0 0.0
    %152 = vmatprep.subr.mxu0 0.0
    %153 = vmatpush1.msra.mxu0 0.0
    %154 = vmatprep.subr.mxu0 0.0
    %155 = vmatpush1.msra.mxu0 0.0
    %156 = vmatprep.subr.mxu0 0.0
    %157 = vmatpush1.msra.mxu0 0.0
    %158 = vmatprep.subr.mxu0 0.0
    %159 = vmatpush1.msra.mxu0 0.0
    %160 = vmatprep.mubr.f32.mxu0 0.0
    %161 = vmatmul.mubr.f32.gmra.mrb[0].mxu0 %v91
    %v162 = vpop.f32.mrb[0].mxu0
    %v163 = vadd.f32 %v88, %v162
    %v164 = vpop.f32.mrb[0].mxu0
    %165 = vmatprep.mubr.f32.mxu0 0.0
    %166 = vmatmul.mubr.f32.gmra.mrb[0].mxu0 %v94
    %v167 = vpop.f32.mrb[0].mxu0
    %v168 = vadd.f32 %v88, %v167
    %v169 = vpop.f32.mrb[0].mxu0
    %170 = vdwg.mxu0
    %171 = vst [vmem:[#allocation7] sm:$0xff] %v163
    %172 = vst [vmem:[#allocation7 + $0x8] sm:$0xff] %v168
    // Predicated region
    $region22: #{tpu_custom_call.1} parent=1 // pred_check
      _
    $region23: #{tpu_custom_call.1} parent=1 // pred_check_branch
      %174 = sbr.rel (0) target = $region25
    $region24: #{tpu_custom_call.1} parent=1 // pred_region
      %s176 = ssub.s32 256, 256
      %177 = vsyncadd [#allocation4], %s176
      %s178 = sshll.u32 [#allocation7], 4
      %s179 = int_to_ptr.vmem [resolvable:$true] %s178
      %184 = dma.vmem_to_hbm [thread:$0]  %s179, 256, %s3, [#allocation4], 128, 128, 8
    $region25: #{tpu_custom_call.1} parent=1 // pred_fallthru
      _
    // Predicated region
    $region26: #{tpu_custom_call.1} parent=1 // pred_check
      _
    $region27: #{tpu_custom_call.1} parent=1 // pred_check_branch
      %186 = sbr.rel (0) target = $region29
    $region28: #{tpu_custom_call.1} parent=1 // pred_region
      %187 = dma.done [#allocation4], 256
    $region29: #{tpu_custom_call.1} parent=1 // pred_fallthru
      _
    %188 = vsyncpa [#allocation3], 1
    %189 = vsyncpa [#allocation6], 1
    %190 = vsyncpa [#allocation4], 1

</llo_original>
